<compile_context>
chip_gen: v5e
topology: v5e:2x2
jax: 0.10.0
libtpu: 0.0.40
codegen_flags: <defaults>
</compile_context>

<pallas_src>
import jax
import jax.numpy as jnp
from jax.experimental import pallas as pl
from jax.experimental.pallas import tpu as pltpu


# ---------------------------------------------------------------------------
# Fused single-pass kernel: pool + gate + rescale (one HBM read, one write).
# ---------------------------------------------------------------------------
def _se_fused_kernel(x_ref, w1t_ref, b1_ref, w2t_ref, b2_ref, o_ref):
    # x_ref/o_ref: (Nb, C, HW)   w1t_ref: (C, mid)  b1_ref: (1, mid) f32
    # w2t_ref: (mid, C)          b2_ref:  (1, C) f32

    # Squeeze: AdaptiveAvgPool2d(1) == mean over the spatial (lane) axis.
    # Accumulate in f32 (important for bf16 inputs / large HW).
    pooled = jnp.mean(x_ref[...].astype(jnp.float32), axis=-1)          # (Nb, C)

    # Excitation: two 1x1 convs as lane-dense row-vector matmuls.
    h = jnp.dot(pooled, w1t_ref[...], preferred_element_type=jnp.float32)
    h = jnp.maximum(h + b1_ref[...], 0.0)                               # (Nb, mid)
    s = jnp.dot(h, w2t_ref[...], preferred_element_type=jnp.float32)
    s = jax.nn.sigmoid(s + b2_ref[...])                                 # (Nb, C) f32

    # Rescale: multiply in f32 against a (Nb, C, 1) splat, cast once.
    # x_ref is re-read here (second streaming pass over the VMEM block) instead
    # of reusing a block-sized live value from the pooling read.
    o_ref[...] = (x_ref[...].astype(jnp.float32) * s[:, :, None]).astype(o_ref.dtype)


# ---------------------------------------------------------------------------
# Two-pass fallback: elementwise rescale kernel (gate computed outside).
# ---------------------------------------------------------------------------
def _se_rescale_kernel(x_ref, s_ref, o_ref):
    # x_ref: (Nb, C, hw_tile)   s_ref: (Nb, C, 1) f32   o_ref: (Nb, C, hw_tile)
    o_ref[...] = (x_ref[...].astype(jnp.float32) * s_ref[...]).astype(o_ref.dtype)


# ---------------------------------------------------------------------------
# Helpers.
# ---------------------------------------------------------------------------
def _vmem_capacity_bytes():
    try:
        return int(pltpu.get_tpu_info().vmem_capacity_bytes)
    except Exception:
        return 64 << 20  # conservative fallback = v7x per-TensorCore VMEM


def _pick_batch(n, per_item_bytes, target_bytes):
    """Items per block: aim for ~target_bytes blocks, keep the grid >= ~4 steps
    (pipeline depth + v7x megacore), and keep nb a multiple of 8 when >= 8."""
    nb = max(1, target_bytes // max(per_item_bytes, 1))
    nb = min(nb, max(1, n // 4))          # keep grid depth for pipelining
    if nb >= 8:
        nb = (nb // 8) * 8                # sublane-friendly gate tiles
    return int(min(max(nb, 1), n))


def se_module(x_nchw, w1, b1, w2, b2, *,
              fused_block_budget_bytes=None,
              target_block_bytes=2 << 20):
    """x_nchw: (N, C, H, W). w1: (mid, C), b1: (mid,), w2: (C, mid), b2: (C,)."""
    N, C, H, W = x_nchw.shape
    HW = H * W
    mid = w1.shape[0]
    itemsize = jnp.dtype(x_nchw.dtype).itemsize

    x_flat = x_nchw.reshape(N, C, HW)                       # free row-major view
    weight_bytes = (2 * C * mid + mid + C) * 4
    per_image_bytes = C * HW * itemsize

    vmem_cap = _vmem_capacity_bytes()
    vmem_ceiling = vmem_cap - (16 << 20)                    # compiler headroom
    if fused_block_budget_bytes is None:
        # ~77 MiB on 128-MiB parts (v5e/v6e), ~38 MiB on 64-MiB v7x.
        fused_block_budget_bytes = min(int(vmem_cap * 0.6), 96 << 20)
    budget = min(fused_block_budget_bytes, vmem_ceiling - (2 << 20))

    nb = _pick_batch(N, per_image_bytes, target_block_bytes)
    block_bytes = nb * per_image_bytes
    fused_fits = 4 * block_bytes + 4 * weight_bytes + (2 << 20) <= budget

    # ------------------------------------------------------------------
    # Path A: fused single pass (whole image(s) per block fit in VMEM).
    # ------------------------------------------------------------------
    if fused_fits:
        grid_n = pl.cdiv(N, nb)   # tail block (if any) is discarded on writeback
        vmem_limit = int(min(4 * block_bytes + 4 * weight_bytes + (4 << 20),
                             vmem_ceiling))

        # Lane-dense gate parameters: pre-transposed weights, f32 row biases.
        w1_t = jnp.transpose(w1)                     # (C, mid)
        w2_t = jnp.transpose(w2)                     # (mid, C)
        b1_row = b1.reshape(1, mid).astype(jnp.float32)
        b2_row = b2.reshape(1, C).astype(jnp.float32)

        cost = pl.CostEstimate(
            flops=2 * N * C * HW + 4 * N * C * mid,
            transcendentals=N * C,
            bytes_accessed=2 * N * C * HW * itemsize + 2 * weight_bytes,
        )

        out_flat = pl.pallas_call(
            _se_fused_kernel,
            out_shape=jax.ShapeDtypeStruct((N, C, HW), x_nchw.dtype),
            grid_spec=pltpu.PrefetchScalarGridSpec(
                num_scalar_prefetch=0,
                grid=(grid_n,),
                in_specs=[
                    pl.BlockSpec((nb, C, HW), lambda n: (n, 0, 0)),
                    pl.BlockSpec((C, mid), lambda n: (0, 0)),
                    pl.BlockSpec((1, mid), lambda n: (0, 0)),
                    pl.BlockSpec((mid, C), lambda n: (0, 0)),
                    pl.BlockSpec((1, C), lambda n: (0, 0)),
                ],
                out_specs=pl.BlockSpec((nb, C, HW), lambda n: (n, 0, 0)),
            ),
            compiler_params=pltpu.CompilerParams(
                dimension_semantics=("parallel",),
                vmem_limit_bytes=vmem_limit,
            ),
            cost_estimate=cost,
        )(x_flat, w1_t, b1_row, w2_t, b2_row)
        return out_flat.reshape(N, C, H, W)

    # ------------------------------------------------------------------
    # Path B: two-pass fallback for feature maps too large for VMEM.
    # Pool + gate are microscopic -> plain XLA (f32); rescale streams x.
    # ------------------------------------------------------------------
    pooled = jnp.mean(x_flat.astype(jnp.float32), axis=-1)              # (N, C)
    h = jnp.maximum(pooled @ w1.astype(jnp.float32).T
                    + b1.astype(jnp.float32), 0.0)                      # (N, mid)
    s = jax.nn.sigmoid(h @ w2.astype(jnp.float32).T
                       + b2.astype(jnp.float32))                        # (N, C) f32
    s3 = s.reshape(N, C, 1)                                             # keep f32

    row_bytes = C * itemsize
    if HW * row_bytes <= target_block_bytes or HW <= 128:
        hw_tile = HW                                   # full (possibly ragged) dim
        nb_b = max(1, min(N, target_block_bytes // max(HW * row_bytes, 1)))
        nb_b = min(nb_b, max(1, N // 4))
        if nb_b >= 8:
            nb_b = (nb_b // 8) * 8
    else:
        nb_b = 1
        hw_tile = min(HW, max(128, (target_block_bytes // row_bytes) // 128 * 128))
    block_bytes_b = nb_b * C * hw_tile * itemsize
    vmem_limit_b = int(min(4 * block_bytes_b + (4 << 20), vmem_ceiling))

    cost = pl.CostEstimate(
        flops=N * C * HW,
        transcendentals=0,
        bytes_accessed=2 * N * C * HW * itemsize + N * C * 4,
    )

    out_flat = pl.pallas_call(
        _se_rescale_kernel,
        out_shape=jax.ShapeDtypeStruct((N, C, HW), x_nchw.dtype),
        grid_spec=pltpu.PrefetchScalarGridSpec(
            num_scalar_prefetch=0,
            grid=(pl.cdiv(N, nb_b), pl.cdiv(HW, hw_tile)),
            in_specs=[
                pl.BlockSpec((nb_b, C, hw_tile), lambda n, t: (n, 0, t)),
                pl.BlockSpec((nb_b, C, 1), lambda n, t: (n, 0, 0)),
            ],
            out_specs=pl.BlockSpec((nb_b, C, hw_tile), lambda n, t: (n, 0, t)),
        ),
        compiler_params=pltpu.CompilerParams(
            dimension_semantics=("parallel", "parallel"),
            vmem_limit_bytes=vmem_limit_b,
        ),
        cost_estimate=cost,
    )(x_flat, s3)
    return out_flat.reshape(N, C, H, W)


def _reference(x, w1, b1, w2, b2):
    # Pure-JAX reference of the SE forward for correctness checks.
    pooled = jnp.mean(x, axis=(2, 3))                            # (N, C)
    h = jnp.maximum(pooled @ w1.T + b1, 0.0)                     # (N, mid)
    s = jax.nn.sigmoid(h @ w2.T + b2)                            # (N, C)
    return x * s[:, :, None, None]


def _make_params(key, C, mid, dtype):
    k1, kb1, k2, kb2 = jax.random.split(key, 4)
    # Conv2d(c, mid, 1) weight is (mid, c, 1, 1) -> (mid, c); Conv2d(mid, c, 1) -> (c, mid)
    w1 = (0.1 * jax.random.normal(k1, (mid, C), dtype=jnp.float32)).astype(dtype)
    b1 = (0.1 * jax.random.normal(kb1, (mid,), dtype=jnp.float32)).astype(dtype)
    w2 = (0.1 * jax.random.normal(k2, (C, mid), dtype=jnp.float32)).astype(dtype)
    b2 = (0.1 * jax.random.normal(kb2, (C,), dtype=jnp.float32)).astype(dtype)
    return w1, b1, w2, b2


if __name__ == "__main__":
    key = jax.random.PRNGKey(0)
    kx, kx2, kp = jax.random.split(key, 3)

    # --- Primary test: N=2, C=16, 16x16 (HW=256, lane-dense), mid = max(C//4, 8) = 8.
    N, C, H, W = 2, 16, 16, 16
    mid = max(C // 4, 8)
    x = jax.random.normal(kx, (N, C, H, W), dtype=jnp.float32)
    w1, b1, w2, b2 = _make_params(kp, C, mid, jnp.float32)
    ref = _reference(x, w1, b1, w2, b2)

    out_fused = jax.block_until_ready(se_module(x, w1, b1, w2, b2))
    assert out_fused.shape == (N, C, H, W)
    assert jnp.allclose(out_fused, ref, atol=1e-5, rtol=1e-5), \
        "fused path mismatch vs JAX reference"

    # --- Force the two-pass (large-feature-map) fallback and verify it too.
    out_2pass = jax.block_until_ready(
        se_module(x, w1, b1, w2, b2, fused_block_budget_bytes=1))
    assert jnp.allclose(out_2pass, ref, atol=1e-5, rtol=1e-5), \
        "two-pass path mismatch vs JAX reference"

    # --- Ragged spatial dim (7x7, HW=49 not a multiple of 128): correctness of
    #     the masked-lane fused path (see TODO(synk) on lane-dense flat slab).
    x_r = jax.random.normal(kx2, (2, C, 7, 7), dtype=jnp.float32)
    ref_r = _reference(x_r, w1, b1, w2, b2)
    out_r = jax.block_until_ready(se_module(x_r, w1, b1, w2, b2))
    assert jnp.allclose(out_r, ref_r, atol=1e-5, rtol=1e-5), \
        "ragged-HW fused path mismatch vs JAX reference"

    # --- bf16 input: pooling/gate/rescale accumulate in f32, single output cast.
    x_bf = x.astype(jnp.bfloat16)
    w1b, b1b, w2b, b2b = (p.astype(jnp.bfloat16) for p in (w1, b1, w2, b2))
    ref_bf = _reference(x_bf.astype(jnp.float32), w1b.astype(jnp.float32),
                        b1b.astype(jnp.float32), w2b.astype(jnp.float32),
                        b2b.astype(jnp.float32))
    out_bf = jax.block_until_ready(se_module(x_bf, w1b, b1b, w2b, b2b))
    assert out_bf.dtype == jnp.bfloat16
    assert jnp.allclose(out_bf.astype(jnp.float32), ref_bf, atol=5e-2, rtol=5e-2), \
        "bf16 fused path mismatch vs f32 JAX reference"

    print("KERNEL_OK")
</pallas_src>

<mosaic_0001>
module attributes {stable_mosaic.version = 11 : i64} {
  func.func @_se_fused_kernel(%arg0: i32, %arg1: memref<1x16x256xf32, #tpu.memory_space<vmem>>, %arg2: memref<16x8xf32, #tpu.memory_space<vmem>>, %arg3: memref<1x8xf32, #tpu.memory_space<vmem>>, %arg4: memref<8x16xf32, #tpu.memory_space<vmem>>, %arg5: memref<1x16xf32, #tpu.memory_space<vmem>>, %arg6: memref<1x16x256xf32, #tpu.memory_space<vmem>>) attributes {dimension_semantics = [#tpu.dimension_semantics<parallel>], iteration_bounds = array<i64: 2>, scalar_prefetch = 0 : i64, scratch_operands = 0 : i64, tpu.core_type = #tpu.core_type<tc>, window_params = [{transform_indices = @transform_0, window_bounds = array<i64: 1, 16, 256>}, {pipeline_mode = #tpu.pipeline_mode<synchronous>, transform_indices = @transform_1, window_bounds = array<i64: 16, 8>}, {pipeline_mode = #tpu.pipeline_mode<synchronous>, transform_indices = @transform_2, window_bounds = array<i64: 1, 8>}, {pipeline_mode = #tpu.pipeline_mode<synchronous>, transform_indices = @transform_3, window_bounds = array<i64: 8, 16>}, {pipeline_mode = #tpu.pipeline_mode<synchronous>, transform_indices = @transform_4, window_bounds = array<i64: 1, 16>}, {transform_indices = @transform_5, window_bounds = array<i64: 1, 16, 256>}]} {
    %c0 = arith.constant 0 : index
    %c0_0 = arith.constant 0 : index
    %c0_1 = arith.constant 0 : index
    %0 = vector.load %arg1[%c0, %c0_0, %c0_1] : memref<1x16x256xf32, #tpu.memory_space<vmem>>, vector<1x16x256xf32>
    %cst = arith.constant dense<0.000000e+00> : vector<1x16xf32>
    %1 = vector.multi_reduction <add>, %0, %cst [2] : vector<1x16x256xf32> to vector<1x16xf32>
    %cst_2 = arith.constant 2.560000e+02 : f32
    %2 = vector.broadcast %cst_2 : f32 to vector<1x16xf32>
    %3 = arith.divf %1, %2 : vector<1x16xf32>
    %c0_3 = arith.constant 0 : index
    %c0_4 = arith.constant 0 : index
    %4 = vector.load %arg2[%c0_3, %c0_4] : memref<16x8xf32, #tpu.memory_space<vmem>>, vector<16x8xf32>
    %cst_5 = arith.constant dense<0.000000e+00> : vector<1x8xf32>
    %5 = tpu.matmul %3, %4, %cst_5 {dimension_numbers = #tpu.dot_dimension_numbers<[1], [0], [0], [1], [0, 0, 1, 1], [], []>} : vector<1x16xf32>, vector<16x8xf32>, vector<1x8xf32> -> vector<1x8xf32>
    %c0_6 = arith.constant 0 : index
    %c0_7 = arith.constant 0 : index
    %6 = vector.load %arg3[%c0_6, %c0_7] : memref<1x8xf32, #tpu.memory_space<vmem>>, vector<1x8xf32>
    %7 = arith.addf %5, %6 : vector<1x8xf32>
    %cst_8 = arith.constant 0.000000e+00 : f32
    %8 = vector.broadcast %cst_8 : f32 to vector<1x8xf32>
    %9 = arith.maximumf %7, %8 : vector<1x8xf32>
    %c0_9 = arith.constant 0 : index
    %c0_10 = arith.constant 0 : index
    %10 = vector.load %arg4[%c0_9, %c0_10] : memref<8x16xf32, #tpu.memory_space<vmem>>, vector<8x16xf32>
    %cst_11 = arith.constant dense<0.000000e+00> : vector<1x16xf32>
    %11 = tpu.matmul %9, %10, %cst_11 {dimension_numbers = #tpu.dot_dimension_numbers<[1], [0], [0], [1], [0, 0, 1, 1], [], []>} : vector<1x8xf32>, vector<8x16xf32>, vector<1x16xf32> -> vector<1x16xf32>
    %c0_12 = arith.constant 0 : index
    %c0_13 = arith.constant 0 : index
    %12 = vector.load %arg5[%c0_12, %c0_13] : memref<1x16xf32, #tpu.memory_space<vmem>>, vector<1x16xf32>
    %13 = arith.addf %11, %12 : vector<1x16xf32>
    %14 = arith.negf %13 : vector<1x16xf32>
    %15 = math.exp %14 : vector<1x16xf32>
    %cst_14 = arith.constant 1.000000e+00 : f32
    %16 = vector.broadcast %cst_14 : f32 to vector<1x16xf32>
    %17 = arith.addf %16, %15 : vector<1x16xf32>
    %18 = arith.divf %16, %17 : vector<1x16xf32>
    %c0_15 = arith.constant 0 : index
    %c0_16 = arith.constant 0 : index
    %c0_17 = arith.constant 0 : index
    %19 = vector.load %arg1[%c0_15, %c0_16, %c0_17] : memref<1x16x256xf32, #tpu.memory_space<vmem>>, vector<1x16x256xf32>
    %20 = vector.shape_cast %18 : vector<1x16xf32> to vector<1x16x1xf32>
    %21 = vector.broadcast %20 : vector<1x16x1xf32> to vector<1x16x256xf32>
    %22 = arith.mulf %19, %21 : vector<1x16x256xf32>
    %c0_18 = arith.constant 0 : index
    %c0_19 = arith.constant 0 : index
    %c0_20 = arith.constant 0 : index
    %23 = vector.load %arg6[%c0_18, %c0_19, %c0_20] : memref<1x16x256xf32, #tpu.memory_space<vmem>>, vector<1x16x256xf32>
    tpu.vector_store %arg6[%c0_18, %c0_19, %c0_20], %22 {strides = array<i32>} : memref<1x16x256xf32, #tpu.memory_space<vmem>>, vector<1x16x256xf32>,
    return
  }
  func.func @transform_0(%arg0: i32) -> (i32, i32, i32) {
    %c0_i32 = arith.constant 0 : i32
    %c0_i32_0 = arith.constant 0 : i32
    %c0_i32_1 = arith.constant 0 : i32
    return %arg0, %c0_i32, %c0_i32_0 : i32, i32, i32
  }
  func.func @transform_1(%arg0: i32) -> (i32, i32) {
    %c0_i32 = arith.constant 0 : i32
    %c0_i32_0 = arith.constant 0 : i32
    %c0_i32_1 = arith.constant 0 : i32
    return %c0_i32, %c0_i32_0 : i32, i32
  }
  func.func @transform_2(%arg0: i32) -> (i32, i32) {
    %c0_i32 = arith.constant 0 : i32
    %c0_i32_0 = arith.constant 0 : i32
    %c0_i32_1 = arith.constant 0 : i32
    return %c0_i32, %c0_i32_0 : i32, i32
  }
  func.func @transform_3(%arg0: i32) -> (i32, i32) {
    %c0_i32 = arith.constant 0 : i32
    %c0_i32_0 = arith.constant 0 : i32
    %c0_i32_1 = arith.constant 0 : i32
    return %c0_i32, %c0_i32_0 : i32, i32
  }
  func.func @transform_4(%arg0: i32) -> (i32, i32) {
    %c0_i32 = arith.constant 0 : i32
    %c0_i32_0 = arith.constant 0 : i32
    %c0_i32_1 = arith.constant 0 : i32
    return %c0_i32, %c0_i32_0 : i32, i32
  }
  func.func @transform_5(%arg0: i32) -> (i32, i32, i32) {
    %c0_i32 = arith.constant 0 : i32
    %c0_i32_0 = arith.constant 0 : i32
    %c0_i32_1 = arith.constant 0 : i32
    return %arg0, %c0_i32, %c0_i32_0 : i32, i32, i32
  }
}

</mosaic_0001>

<llo_original>
// kernel: tpu_custom_call.1
$region0: #{tpu_custom_call.1}
  #allocation0 [shape = 'u32[]', space=smem, size = 0x4, offset = 0x4, fixed_abs, tag = 'smem constant byte address 0x4 - core index']
  #allocation1 [shape = 'u32[72,128]{1,0:T(1,128)}', space=vmem, size = 0x9000, scoped, tag = 'internal scratch']
  %s0 = inlined_call_operand.hbm [shape: f32[2,16,256], index: 0, kind: input, shape index: {}]
  %s1 = inlined_call_operand.vmem [shape: f32[16,8], index: 1, kind: input, shape index: {}]
  %s2 = inlined_call_operand.vmem [shape: f32[1,8], index: 2, kind: input, shape index: {}]
  %s3 = inlined_call_operand.vmem [shape: f32[8,16], index: 3, kind: input, shape index: {}]
  %s4 = inlined_call_operand.vmem [shape: f32[1,16], index: 4, kind: input, shape index: {}]
  %s5 = inlined_call_operand.hbm [shape: f32[2,16,256], index: 5, kind: output, shape index: {}]
  %s6 = sld [smem:[#allocation0]]
  $region57: #{tpu_custom_call.1} parent=0
    _
  %s8 = ssub.s32 1, %s6
  %s9 = scalar_select 0, %s8, %s6
  $region1: #{tpu_custom_call.1} parent=0
    #allocation2 [shape = 'u8[32768]{0}', space=vmem, size = 0x8000, scoped, tag = 'input window, operand 0']
    #allocation3 [shape = 's32[2]{0}', space=sflag, size = 0x8, scoped, tag = 'scoped memory for tpu_custom_call.1']
    #allocation4 [shape = 's32[2]{0}', space=sflag, size = 0x8, scoped, tag = 'scoped memory for tpu_custom_call.1']
    #allocation5 [shape = 'u8[32768]{0}', space=vmem, size = 0x8000, scoped, tag = 'output window, operand 0']
    %10 = vsyncpa [#allocation3], 0
    %s11 = scalar_lea.sflag [#allocation3], 1
    %12 = vsyncpa %s11, 0
    %13 = vsyncpa [#allocation4], 0
    %s14 = scalar_lea.sflag [#allocation4], 1
    %15 = vsyncpa %s14, 0
    loop: start=0, step=1, limit=4
    $region2: #{tpu_custom_call.1} parent=1 // loop_pre_header
      _
    $region3: #{tpu_custom_call.1} parent=1 // loop_header
      %s17 = sphi 0, %s21
      %p18 = scmp.ge.s32.totalorder %s17, 4
      %s27 = sphi 0, %s29
      %s30 = sphi 0, %s27
      %s31 = sphi 0, %s30
      %s47 = sphi 0, %s31
      %s51 = sphi 0, %s51
      %s53 = sphi 0, %s51
      %s54 = sphi 0, %s53
      %s68 = sphi 0, %s54
      %s72 = sphi 0, %s72
      %s74 = sphi 0, %s72
      %s75 = sphi 0, %s74
      %s89 = sphi 0, %s75
      %s93 = sphi 0, %s93
      %s95 = sphi 0, %s93
      %s96 = sphi 0, %s95
      %s110 = sphi 0, %s96
      %s114 = sphi 0, %s114
      %s116 = sphi 0, %s114
      %s117 = sphi 0, %s116
      %s131 = sphi 0, %s117
      %s137 = sphi 0, %s139
      %s140 = sphi 0, %s137
      %s141 = sphi 0, %s140
      %s157 = sphi 0, %s141
    $region4: #{tpu_custom_call.1} parent=1 // loop_header_branch
      %20 = sbr.rel (%p18) target = $region8
    $region5: #{tpu_custom_call.1} parent=1 // loop_body
      %s22 = ssub.s32 %s17, 1
      %s23 = ssub.s32 %s17, 2
      %s24 = sadd.s32 %s17, 1
      %s25 = ssub.s32 %s17, %s24
      %p26 = scmp.eq.s32.totalorder %s25, 0
      %s28 = sadd.s32 %s27, 1
      %s29 = scalar_select %p26, %s27, %s28
      %p32 = pneg %p26
      %p33 = scmp.eq.s32.totalorder %s17, 1
      %p34 = por %p32, %p33
      %p35 = scmp.ne.s32.totalorder %s27, %s30
      %p36 = scmp.eq.s32.totalorder %s17, 0
      %p37 = por %p35, %p36
      %p38 = scmp.ne.s32.totalorder %s27, %s30
      %p39 = scmp.eq.s32.totalorder %s22, 1
      %p40 = por %p38, %p39
      %p41 = scmp.ne.s32.totalorder %s30, %s31
      %p42 = scmp.eq.s32.totalorder %s22, 0
      %p43 = por %p41, %p42
      %p44 = scmp.ne.s32.totalorder %s30, %s31
      %p45 = scmp.eq.s32.totalorder %s23, 1
      %p46 = por %p44, %p45
      %p48 = scmp.ne.s32.totalorder %s31, %s47
      %p49 = scmp.eq.s32.totalorder %s23, 0
      %p50 = por %p48, %p49
      %s52 = sadd.s32 %s51, 1
      %p55 = scmp.eq.s32.totalorder %s17, 1
      %p56 = scmp.ne.s32.totalorder %s51, %s53
      %p57 = scmp.eq.s32.totalorder %s17, 0
      %p58 = por %p56, %p57
      %p59 = scmp.ne.s32.totalorder %s51, %s53
      %p60 = scmp.eq.s32.totalorder %s22, 1
      %p61 = por %p59, %p60
      %p62 = scmp.ne.s32.totalorder %s53, %s54
      %p63 = scmp.eq.s32.totalorder %s22, 0
      %p64 = por %p62, %p63
      %p65 = scmp.ne.s32.totalorder %s53, %s54
      %p66 = scmp.eq.s32.totalorder %s23, 1
      %p67 = por %p65, %p66
      %p69 = scmp.ne.s32.totalorder %s54, %s68
      %p70 = scmp.eq.s32.totalorder %s23, 0
      %p71 = por %p69, %p70
      %s73 = sadd.s32 %s72, 1
      %p76 = scmp.eq.s32.totalorder %s17, 1
      %p77 = scmp.ne.s32.totalorder %s72, %s74
      %p78 = scmp.eq.s32.totalorder %s17, 0
      %p79 = por %p77, %p78
      %p80 = scmp.ne.s32.totalorder %s72, %s74
      %p81 = scmp.eq.s32.totalorder %s22, 1
      %p82 = por %p80, %p81
      %p83 = scmp.ne.s32.totalorder %s74, %s75
      %p84 = scmp.eq.s32.totalorder %s22, 0
      %p85 = por %p83, %p84
      %p86 = scmp.ne.s32.totalorder %s74, %s75
      %p87 = scmp.eq.s32.totalorder %s23, 1
      %p88 = por %p86, %p87
      %p90 = scmp.ne.s32.totalorder %s75, %s89
      %p91 = scmp.eq.s32.totalorder %s23, 0
      %p92 = por %p90, %p91
      %s94 = sadd.s32 %s93, 1
      %p97 = scmp.eq.s32.totalorder %s17, 1
      %p98 = scmp.ne.s32.totalorder %s93, %s95
      %p99 = scmp.eq.s32.totalorder %s17, 0
      %p100 = por %p98, %p99
      %p101 = scmp.ne.s32.totalorder %s93, %s95
      %p102 = scmp.eq.s32.totalorder %s22, 1
      %p103 = por %p101, %p102
      %p104 = scmp.ne.s32.totalorder %s95, %s96
      %p105 = scmp.eq.s32.totalorder %s22, 0
      %p106 = por %p104, %p105
      %p107 = scmp.ne.s32.totalorder %s95, %s96
      %p108 = scmp.eq.s32.totalorder %s23, 1
      %p109 = por %p107, %p108
      %p111 = scmp.ne.s32.totalorder %s96, %s110
      %p112 = scmp.eq.s32.totalorder %s23, 0
      %p113 = por %p111, %p112
      %s115 = sadd.s32 %s114, 1
      %p118 = scmp.eq.s32.totalorder %s17, 1
      %p119 = scmp.ne.s32.totalorder %s114, %s116
      %p120 = scmp.eq.s32.totalorder %s17, 0
      %p121 = por %p119, %p120
      %p122 = scmp.ne.s32.totalorder %s114, %s116
      %p123 = scmp.eq.s32.totalorder %s22, 1
      %p124 = por %p122, %p123
      %p125 = scmp.ne.s32.totalorder %s116, %s117
      %p126 = scmp.eq.s32.totalorder %s22, 0
      %p127 = por %p125, %p126
      %p128 = scmp.ne.s32.totalorder %s116, %s117
      %p129 = scmp.eq.s32.totalorder %s23, 1
      %p130 = por %p128, %p129
      %p132 = scmp.ne.s32.totalorder %s117, %s131
      %p133 = scmp.eq.s32.totalorder %s23, 0
      %p134 = por %p132, %p133
      %s135 = ssub.s32 %s17, %s24
      %p136 = scmp.eq.s32.totalorder %s135, 0
      %s138 = sadd.s32 %s137, 1
      %s139 = scalar_select %p136, %s137, %s138
      %p142 = pneg %p136
      %p143 = scmp.eq.s32.totalorder %s17, 1
      %p144 = por %p142, %p143
      %p145 = scmp.ne.s32.totalorder %s137, %s140
      %p146 = scmp.eq.s32.totalorder %s17, 0
      %p147 = por %p145, %p146
      %p148 = scmp.ne.s32.totalorder %s137, %s140
      %p149 = scmp.eq.s32.totalorder %s22, 1
      %p150 = por %p148, %p149
      %p151 = scmp.ne.s32.totalorder %s140, %s141
      %p152 = scmp.eq.s32.totalorder %s22, 0
      %p153 = por %p151, %p152
      %p154 = scmp.ne.s32.totalorder %s140, %s141
      %p155 = scmp.eq.s32.totalorder %s23, 1
      %p156 = por %p154, %p155
      %p158 = scmp.ne.s32.totalorder %s141, %s157
      %p159 = scmp.eq.s32.totalorder %s23, 0
      %p160 = por %p158, %p159
      %p161 = scmp.le.s32.totalorder 1, %s17
      %p162 = scmp.lt.s32.totalorder %s17, 3
      %p163 = pnand %p161, %p162
      %p164 = pneg %p163
      // Predicated region
      $region9: #{tpu_custom_call.1} parent=5 // pred_check
        _
      $region10: #{tpu_custom_call.1} parent=5 // pred_check_branch
        %166 = sbr.rel (%p163) target = $region12
      $region11: #{tpu_custom_call.1} parent=5 // pred_region
        %s167 = ssub.s32 %s17, 1
        // Predicated region
        $region13: #{tpu_custom_call.1} parent=11 // pred_check
          %p168 = pneg %p64
        $region14: #{tpu_custom_call.1} parent=11 // pred_check_branch
          %170 = sbr.rel (%p168) target = $region16
        $region15: #{tpu_custom_call.1} parent=11 // pred_region
          _
        $region16: #{tpu_custom_call.1} parent=11 // pred_fallthru
          _
        // Predicated region
        $region17: #{tpu_custom_call.1} parent=11 // pred_check
          %p171 = pneg %p85
        $region18: #{tpu_custom_call.1} parent=11 // pred_check_branch
          %173 = sbr.rel (%p171) target = $region20
        $region19: #{tpu_custom_call.1} parent=11 // pred_region
          _
        $region20: #{tpu_custom_call.1} parent=11 // pred_fallthru
          _
        // Predicated region
        $region21: #{tpu_custom_call.1} parent=11 // pred_check
          %p174 = pneg %p106
        $region22: #{tpu_custom_call.1} parent=11 // pred_check_branch
          %176 = sbr.rel (%p174) target = $region24
        $region23: #{tpu_custom_call.1} parent=11 // pred_region
          _
        $region24: #{tpu_custom_call.1} parent=11 // pred_fallthru
          _
        // Predicated region
        $region25: #{tpu_custom_call.1} parent=11 // pred_check
          %p177 = pneg %p127
        $region26: #{tpu_custom_call.1} parent=11 // pred_check_branch
          %179 = sbr.rel (%p177) target = $region28
        $region27: #{tpu_custom_call.1} parent=11 // pred_region
          _
        $region28: #{tpu_custom_call.1} parent=11 // pred_fallthru
          _
      $region12: #{tpu_custom_call.1} parent=5 // pred_fallthru
        _
      %p180 = scmp.lt.s32.totalorder %s17, 2
      // Predicated region
      $region29: #{tpu_custom_call.1} parent=5 // pred_check
        %p181 = pneg %p180
      $region30: #{tpu_custom_call.1} parent=5 // pred_check_branch
        %183 = sbr.rel (%p181) target = $region32
      $region31: #{tpu_custom_call.1} parent=5 // pred_region
        // Predicated region
        $region33: #{tpu_custom_call.1} parent=31 // pred_check
          %p184 = pneg %p37
        $region34: #{tpu_custom_call.1} parent=31 // pred_check_branch
          %186 = sbr.rel (%p184) target = $region36
        $region35: #{tpu_custom_call.1} parent=31 // pred_region
          %s187 = sand.u32 %s27, 1
          %s188 = scalar_lea.sflag [#allocation3], %s187
          %s189 = sand.u32 %s27, 1
          %s190 = smul.addr %s189, 32
          %s191 = scalar_lea.vmem [#allocation2], %s190
          %193 = vsyncadd %s188, 0
          %s194 = smul.addr %s17, 4
          %s195 = smul.addr %s194, 8
          %s196 = scalar_lea.hbm %s0, %s195
          %s197 = sshll.u32 %s196, 4
          %s198 = int_to_ptr.hbm [resolvable:$true] %s197
          %s199 = sshll.u32 %s191, 4
          %s200 = int_to_ptr.vmem [resolvable:$true] %s199
          %205 = dma.hbm_to_vmem [thread:$0]  %s198, 512, %s200, %s188, 256, 256, 16
        $region36: #{tpu_custom_call.1} parent=31 // pred_fallthru
          _
      $region32: #{tpu_custom_call.1} parent=5 // pred_fallthru
        _
      %p206 = scmp.le.s32.totalorder 1, %s17
      %p207 = scmp.lt.s32.totalorder %s17, 3
      %p208 = pnand %p206, %p207
      %p209 = pneg %p208
      // Predicated region
      $region37: #{tpu_custom_call.1} parent=5 // pred_check
        _
      $region38: #{tpu_custom_call.1} parent=5 // pred_check_branch
        %211 = sbr.rel (%p208) target = $region40
      $region39: #{tpu_custom_call.1} parent=5 // pred_region
        %s212 = ssub.s32 %s17, 1
        %s213 = sand.u32 %s30, 1
        %s214 = scalar_lea.sflag [#allocation3], %s213
        %s215 = sand.u32 %s30, 1
        %s216 = smul.addr %s215, 32
        %s217 = scalar_lea.vmem [#allocation2], %s216
        // Predicated region
        $region41: #{tpu_custom_call.1} parent=39 // pred_check
          %p218 = pneg %p43
        $region42: #{tpu_custom_call.1} parent=39 // pred_check_branch
          %220 = sbr.rel (%p218) target = $region44
        $region43: #{tpu_custom_call.1} parent=39 // pred_region
          %222 = dma.done %s214, 512
        $region44: #{tpu_custom_call.1} parent=39 // pred_fallthru
          _
        %s223 = sand.u32 %s30, 1
        %s224 = scalar_lea.sflag [#allocation3], %s223
        %s225 = sand.u32 %s30, 1
        %s226 = smul.addr %s225, 32
        %s227 = scalar_lea.vmem [#allocation2], %s226
        %p228 = pneg %p43
        %p229 = pneg %p40
        %p230 = pneg %p64
        %p231 = pneg %p61
        %p232 = pneg %p85
        %p233 = pneg %p82
        %p234 = pneg %p106
        %p235 = pneg %p103
        %p236 = pneg %p127
        %p237 = pneg %p124
        %p238 = pneg %p153
        %p239 = pneg %p150
        %s240 = sand.u32 %s140, 1
        %s241 = scalar_lea.sflag [#allocation4], %s240
        %s242 = sand.u32 %s140, 1
        %s243 = smul.addr %s242, 32
        %s244 = scalar_lea.vmem [#allocation5], %s243
        %v245 = vld [vmem:[%s217] sm:$0xff]
        %v246 = vld [vmem:[%s217 + $0x8] sm:$0xff]
        %v247 = vld [vmem:[%s217 + $0x10] sm:$0xff]
        %v248 = vld [vmem:[%s217 + $0x18] sm:$0xff]
        %v249 = vadd.f32 %v245, %v246
        %250 = vadd.xlane.f32.xlu0 %v249
        %v251 = vpop.xlane.xlu0 %250
        %v252 = vadd.f32 %v247, %v248
        %253 = vadd.xlane.f32.xlu0 %v252
        %v254 = vpop.xlane.xlu0 %253
        %v255 = vrcp.pop 256.0
        %v256 = vmul.f32 256.0, %v255
        %v257 = vsub.f32 1.0, %v256
        %v258 = vmul.f32 %v255, %v257
        %v259 = vadd.f32 %v255, %v258
        %vm260 = vweird.f32 %v255
        %v261 = vsel %vm260, %v255, %v259
        %v262 = vmul.f32 %v251, %v261
        %v263 = vmul.f32 %v254, %v261
        %v264 = vld [vmem:[%s1] sm:$0xff]
        %v265 = vld [vmem:[%s1 + $0x8] sm:$0xff]
        %v266 = vld [vmem:[%s2] sm:$0x1]
        %v269 = vlaneseq
        %v270 = vand.u32 %v269, 127
        %v271 = vperm.slane %v262, %v270
        %v272 = vadd.s32 %v270, 4294967288
        %v273 = vperm.slane %v263, %v272
        %vm274 = vcmask 130112
        %v275 = vsel %vm274, %v273, %v271
        %vm276 = vcmask 130048
        %v277 = vsel %vm276, %v275, 0
        %279 = vmatpush.msra.mxu0 0.0
        %280 = vmatpush.msra.mxu0 0.0
        %281 = vmatpush.msra.mxu0 0.0
        %282 = vmatpush.msra.mxu0 0.0
        %283 = vmatpush.msra.mxu0 0.0
        %284 = vmatpush.msra.mxu0 0.0
        %285 = vmatpush.msra.mxu0 0.0
        %286 = vmatpush.msra.mxu0 0.0
        %287 = vmatpush.msra.mxu0 0.0
        %288 = vmatpush.msra.mxu0 0.0
        %289 = vmatpush.msra.mxu0 0.0
        %290 = vmatpush.msra.mxu0 0.0
        %291 = vmatpush.msra.mxu0 0.0
        %292 = vmatpush.msra.mxu0 0.0
        %293 = vmatpush.msra.mxu0 %v265
        %294 = vmatpush.msra.mxu0 %v264
        %295 = vmatmul.f32.gmra.mxu0 %v277
        %v296 = vpop.f32.mrf.mxu0
        %v297 = vadd.f32 %v266, %v296
        %298 = vdwg.mxu0
        %v299 = vmax.f32 %v297, 0.0
        %v300 = vld [vmem:[%s3] sm:$0xff]
        %v301 = vld [vmem:[%s4] sm:$0x1]
        %vm302 = vcmask 64512
        %v304 = vsel %vm302, %v299, 0
        %306 = vmatpush.msra.mxu0 0.0
        %307 = vmatpush.msra.mxu0 0.0
        %308 = vmatpush.msra.mxu0 0.0
        %309 = vmatpush.msra.mxu0 0.0
        %310 = vmatpush.msra.mxu0 0.0
        %311 = vmatpush.msra.mxu0 0.0
        %312 = vmatpush.msra.mxu0 0.0
        %313 = vmatpush.msra.mxu0 0.0
        %314 = vmatpush.msra.mxu0 0.0
        %315 = vmatpush.msra.mxu0 0.0
        %316 = vmatpush.msra.mxu0 0.0
        %317 = vmatpush.msra.mxu0 0.0
        %318 = vmatpush.msra.mxu0 0.0
        %319 = vmatpush.msra.mxu0 0.0
        %320 = vmatpush.msra.mxu0 0.0
        %321 = vmatpush.msra.mxu0 %v300
        %322 = vmatmul.f32.gmra.mxu0 %v304
        %v323 = vpop.f32.mrf.mxu0
        %v324 = vadd.f32 %v301, %v323
        %325 = vdwg.mxu0
        %v326 = vxor.u32 %v324, 2147483648
        %v327 = vmul.f32 %v326, 1.442695
        %v328 = vpow.pop %v327
        %v329 = vadd.f32 %v328, 1.0
        %v330 = vrcp.pop %v329
        %v331 = vmul.f32 %v329, %v330
        %v332 = vsub.f32 1.0, %v331
        %v333 = vmul.f32 %v330, %v332
        %v334 = vadd.f32 %v330, %v333
        %vm335 = vweird.f32 %v329
        %vm336 = vweird.f32 %v330
        %vm337 = vmor %vm335, %vm336
        %v338 = vsel %vm337, %v330, %v334
        %v339 = vand.u32 2147483647, %v329
        %vm340 = vcmp.eq.f32.partialorder %v339, 8.507059e+37
        %v341 = vand.u32 %v329, 2147483648
        %v342 = vor.u32 1.1754944e-38, %v341
        %v343 = vsel %vm340, %v342, %v338
        %v344 = vmul.f32 1.0, %v343
        %v345 = vperm.slane %v344, 0
        %v346 = vlaneseq
        %v347 = vshrl.u32 %v346, 7
        %349 = vset.pattern.permute.xlu0 %v347
        %350 = vperm.xlu0 %349, %v345
        %v351 = vpop.permute.xlu0 %350
        %v352 = vlaneseq
        %v353 = vshrl.u32 %v352, 7
        %v354 = vadd.s32 %v353, 8
        %355 = vset.pattern.permute.xlu0 %v354
        %356 = vperm.xlu0 %355, %v345
        %v357 = vpop.permute.xlu0 %356
        %v358 = vmul.f32 %v245, %v351
        %v359 = vmul.f32 %v246, %v351
        %v360 = vmul.f32 %v247, %v357
        %v361 = vmul.f32 %v248, %v357
        %362 = vst [vmem:[%s244] sm:$0xff] %v358
        %363 = vst [vmem:[%s244 + $0x8] sm:$0xff] %v359
        %364 = vst [vmem:[%s244 + $0x10] sm:$0xff] %v360
        %365 = vst [vmem:[%s244 + $0x18] sm:$0xff] %v361
        %s366 = sand.u32 %s140, 1
        %s367 = scalar_lea.sflag [#allocation4], %s366
        %s368 = sand.u32 %s140, 1
        %s369 = smul.addr %s368, 32
        %s370 = scalar_lea.vmem [#allocation5], %s369
        // Predicated region
        $region45: #{tpu_custom_call.1} parent=39 // pred_check
          %p371 = pneg %p150
        $region46: #{tpu_custom_call.1} parent=39 // pred_check_branch
          %373 = sbr.rel (%p371) target = $region48
        $region47: #{tpu_custom_call.1} parent=39 // pred_region
          %375 = vsyncadd %s367, 0
          %s376 = smul.addr %s22, 4
          %s377 = smul.addr %s376, 8
          %s378 = scalar_lea.hbm %s5, %s377
          %s379 = sshll.u32 %s370, 4
          %s380 = int_to_ptr.vmem [resolvable:$true] %s379
          %s381 = sshll.u32 %s378, 4
          %s382 = int_to_ptr.hbm [resolvable:$true] %s381
          %387 = dma.vmem_to_hbm [thread:$0]  %s380, 512, %s382, %s367, 256, 256, 16
        $region48: #{tpu_custom_call.1} parent=39 // pred_fallthru
          _
      $region40: #{tpu_custom_call.1} parent=5 // pred_fallthru
        _
      %p388 = scmp.le.s32.totalorder 2, %s17
      // Predicated region
      $region49: #{tpu_custom_call.1} parent=5 // pred_check
        %p389 = pneg %p388
      $region50: #{tpu_custom_call.1} parent=5 // pred_check_branch
        %391 = sbr.rel (%p389) target = $region52
      $region51: #{tpu_custom_call.1} parent=5 // pred_region
        %s392 = ssub.s32 %s17, 2
        // Predicated region
        $region53: #{tpu_custom_call.1} parent=51 // pred_check
          %p393 = pneg %p156
        $region54: #{tpu_custom_call.1} parent=51 // pred_check_branch
          %395 = sbr.rel (%p393) target = $region56
        $region55: #{tpu_custom_call.1} parent=51 // pred_region
          %s396 = sand.u32 %s141, 1
          %s397 = scalar_lea.sflag [#allocation4], %s396
          %s398 = sand.u32 %s141, 1
          %s399 = smul.addr %s398, 32
          %s400 = scalar_lea.vmem [#allocation5], %s399
          %402 = dma.done %s397, 512
        $region56: #{tpu_custom_call.1} parent=51 // pred_fallthru
          _
      $region52: #{tpu_custom_call.1} parent=5 // pred_fallthru
        _
    $region6: #{tpu_custom_call.1} parent=1 // loop_footer
      %s21 = sadd.s32 1, %s17
    $region7: #{tpu_custom_call.1} parent=1 // loop_footer_branch
      %16 = sbr.rel target = $region3
    $region8: #{tpu_custom_call.1} parent=1 // loop_exit
      _
    %403 = vsyncpa [#allocation3], 1
    %s404 = scalar_lea.sflag [#allocation3], 1
    %405 = vsyncpa %s404, 1
    %406 = vsyncpa [#allocation4], 1
    %s407 = scalar_lea.sflag [#allocation4], 1
    %408 = vsyncpa %s407, 1

</llo_original>
